<compile_context>
chip_gen: v5e
topology: v5e:2x2
jax: 0.10.0
libtpu: 0.0.40
codegen_flags: <defaults>
</compile_context>

<pallas_src>
import functools

import numpy as np
import jax
import jax.numpy as jnp
from jax.experimental import pallas as pl
from jax.experimental.pallas import tpu as pltpu


# ----------------------------------------------------------------------------
# Chip-aware sizing helpers
# ----------------------------------------------------------------------------

_DEFAULT_VMEM_CAPACITY = 64 * 1024 * 1024   # conservative: v7x per-TC VMEM


def _vmem_capacity_bytes():
    try:
        cap = int(pltpu.get_tpu_info().vmem_capacity_bytes)
        if cap > 0:
            return cap
    except Exception:
        pass
    return _DEFAULT_VMEM_CAPACITY


def _max_block_elems():
    """f32 elements per output block.

    Sized from physical VMEM (64 MiB/TC on v7x, 128 MiB on v5e/v6e) so the
    double-buffered in+out pipeline footprint stays around 1/4 of it:
    1M elems (4 MiB) on v7x, 2M elems (8 MiB) on v5e/v6e.  Fewer, bigger
    blocks amortize the ~0.35 us/step overhead on this HBM-bound stream.
    """
    return int(min(2 * 1024 * 1024, max(512 * 1024, _vmem_capacity_bytes() // 64)))


def _row_alignment(dtype):
    """Sublane-packing-aware row tile multiple: 8 (f32), 16 (bf16), 32 (int8)."""
    itemsize = jnp.dtype(dtype).itemsize
    return 8 * max(1, 4 // max(1, itemsize))


def _padded_buf_bytes(rows, cols, itemsize):
    sub = 8 * max(1, 4 // max(1, itemsize))
    r = -(-rows // sub) * sub
    c = -(-cols // 128) * 128
    return r * c * itemsize


def _vmem_limit_for(*buffers):
    """Explicit VMEM budget: 2x (double-buffer) the padded pipeline buffers,
    with headroom, floored at the 32 MiB scoped default and capped well under
    the physical capacity (important on v7x's 64 MiB)."""
    need = 2 * sum(_padded_buf_bytes(*b) for b in buffers)
    limit = max(32 << 20, int(need * 1.25) + (4 << 20))
    return int(min(limit, int(_vmem_capacity_bytes() * 0.85)))


# ----------------------------------------------------------------------------
# Kernels
# ----------------------------------------------------------------------------

def _masked_signflip_kernel(x_ref, sign_ref, out_ref):
    """out = cast_f32(x) * sign, sign broadcast along lanes.

    x_ref    : VMEM (bt, dt) tile, original input dtype
    sign_ref : VMEM (bt, 1) f32, -1.0 where the sample is masked else +1.0
    out_ref  : VMEM (bt, dt) f32 tile
    """
    out_ref[...] = x_ref[...].astype(jnp.float32) * sign_ref[...]


def _signflip_all_kernel(x_ref, out_ref):
    """All-samples-masked fast path: out = -cast_f32(x)."""
    out_ref[...] = -(x_ref[...].astype(jnp.float32))


def _negate_rows_kernel(row_idx_ref, x_ref, out_ref):
    """Masked-rows-only path: negate the (1, dt) row block in place."""
    del row_idx_ref  # only used by the index_maps (scalar prefetch)
    out_ref[...] = -x_ref[...]


# ----------------------------------------------------------------------------
# Tiling
# ----------------------------------------------------------------------------

def _choose_tiles(B, D, row_align, max_elems):
    """Pick (row_tile, lane_tile) for a (B, D) elementwise kernel.

    Row tile is a multiple of `row_align` (dtype-aware sublane packing) or the
    full B; lane tile is a multiple of 128 or the full D; block stays
    <= max_elems f32 elements.  Ragged edges are handled by Pallas.
    """
    if B * D <= max_elems:
        return B, D
    rows_fit = max_elems // D
    if rows_fit >= B:
        bt = B
    elif rows_fit >= row_align:
        bt = (rows_fit // row_align) * row_align
    else:
        bt = min(B, row_align)
    if bt * D <= max_elems:
        dt = D
    else:
        dt = max(128, ((max_elems // bt) // 128) * 128)
        dt = min(dt, D)
    return bt, dt


def _ensure_two_blocks(B, D, bt, dt, row_align):
    """If the grid would be a single step, split one parallel axis (when the
    alignment rules allow) so both TensorCores engage on v7x."""
    if pl.cdiv(B, bt) * pl.cdiv(D, dt) >= 2:
        return bt, dt
    if bt >= 2 * row_align:
        half = -(-((bt + 1) // 2) // row_align) * row_align
        half = min(half, bt - row_align)
        if half >= row_align:
            return half, dt
    if dt >= 2 * 128:
        half = -(-((dt + 1) // 2) // 128) * 128
        half = min(half, dt - 128)
        if half >= 128:
            return bt, half
    return bt, dt


# ----------------------------------------------------------------------------
# Pallas wrappers
# ----------------------------------------------------------------------------

def _pallas_apply(x2d, sign):
    """Dense (every element touched) sign-flip over a (B, D) view of X.

    x2d  : (B, D) array in its *original* dtype (f32 cast fused in-kernel).
    sign : (B, 1) f32 of +/-1.0, or None for the all-masked fast path.
    Returns (B, D) float32.
    """
    B, D = x2d.shape
    itemsize = jnp.dtype(x2d.dtype).itemsize
    row_align = _row_alignment(x2d.dtype)
    max_elems = _max_block_elems()
    bt, dt = _choose_tiles(B, D, row_align, max_elems)
    bt, dt = _ensure_two_blocks(B, D, bt, dt, row_align)
    grid = (pl.cdiv(B, bt), pl.cdiv(D, dt))

    x_spec = pl.BlockSpec((bt, dt), lambda i, j: (i, j))
    o_spec = pl.BlockSpec((bt, dt), lambda i, j: (i, j))

    if sign is None:
        params = pltpu.CompilerParams(
            dimension_semantics=("parallel", "parallel"),
            vmem_limit_bytes=_vmem_limit_for((bt, dt, itemsize), (bt, dt, 4)),
        )
        return pl.pallas_call(
            _signflip_all_kernel,
            out_shape=jax.ShapeDtypeStruct((B, D), jnp.float32),
            grid=grid,
            in_specs=[x_spec],
            out_specs=o_spec,
            compiler_params=params,
        )(x2d)

    s_spec = pl.BlockSpec((bt, 1), lambda i, j: (i, 0))
    params = pltpu.CompilerParams(
        dimension_semantics=("parallel", "parallel"),
        vmem_limit_bytes=_vmem_limit_for(
            (bt, dt, itemsize), (bt, dt, 4), (bt, 1, 4)),
    )
    return pl.pallas_call(
        _masked_signflip_kernel,
        out_shape=jax.ShapeDtypeStruct((B, D), jnp.float32),
        grid=grid,
        in_specs=[x_spec, s_spec],
        out_specs=o_spec,
        compiler_params=params,
    )(x2d, sign)


@functools.partial(jax.jit, donate_argnums=(1,))
def _negate_masked_rows_inplace(row_idx, x2d):
    """Negate only the rows listed in `row_idx`, writing into the aliased
    (donated) input buffer.  Unvisited rows cost zero HBM traffic.

    row_idx : (M,) int32 masked row indices (scalar-prefetch operand).
    x2d     : (B, D) float32, donated.
    """
    B, D = x2d.shape
    M = row_idx.shape[0]
    max_elems = _max_block_elems()
    # A (1, dt) block is padded to 8 sublanes in VMEM; budget dt accordingly.
    dt_cap = max(128, ((max_elems // 8) // 128) * 128)
    dt = D if D <= dt_cap else dt_cap
    grid = (M, pl.cdiv(D, dt))

    grid_spec = pltpu.PrefetchScalarGridSpec(
        num_scalar_prefetch=1,
        grid=grid,
        in_specs=[pl.BlockSpec((1, dt), lambda i, j, idx: (idx[i], j))],
        out_specs=pl.BlockSpec((1, dt), lambda i, j, idx: (idx[i], j)),
    )
    return pl.pallas_call(
        _negate_rows_kernel,
        out_shape=jax.ShapeDtypeStruct((B, D), jnp.float32),
        grid_spec=grid_spec,
        # Operand indices include the scalar-prefetch arg: x2d is operand 1.
        input_output_aliases={1: 0},
        compiler_params=pltpu.CompilerParams(
            dimension_semantics=("parallel", "parallel"),
            vmem_limit_bytes=_vmem_limit_for((8, dt, 4), (8, dt, 4)),
        ),
    )(row_idx, x2d)


# ----------------------------------------------------------------------------
# Module forward
# ----------------------------------------------------------------------------

# Below this element count a fused XLA elementwise beats Mosaic launch overhead.
_XLA_FALLBACK_ELEMS = 128 * 1024


def transform_forward(X, y=None, probability=1.0, random_state=None,
                      force_pallas=False):
    """JAX/Pallas equivalent of Transform.forward (operation = sign flip)."""
    X = jnp.asarray(X)           # keep original dtype; f32 cast fused in-kernel
    orig_shape = X.shape

    xb = X if X.ndim >= 3 else X[None, ...]
    B = xb.shape[0]
    D = int(np.prod(xb.shape[1:])) if xb.ndim > 1 else 1

    if y is not None:
        out_y = jnp.asarray(y)
        if out_y.ndim == 0:
            out_y = out_y.reshape(1)
    else:
        out_y = jnp.zeros((B,), dtype=jnp.float32)

    # Host-side mask sampling, matching check_random_state(seed).uniform(size=B).
    # TODO(synk): random_state=None seeds a fresh RandomState here, whereas
    # sklearn's check_random_state(None) returns numpy's global RNG.
    rng = np.random.RandomState(random_state)
    mask = probability > rng.uniform(size=B)     # concrete numpy bool (B,)

    if not mask.any():
        # Nothing to transform: only the float32 cast (torch `.float()`).
        out_X = xb.astype(jnp.float32)
    elif (not force_pallas) and (B * D < _XLA_FALLBACK_ELEMS):
        # Tiny input: skip Mosaic, do a fused XLA select on the f32 view.
        xf = xb.reshape(B, D).astype(jnp.float32)
        m = jnp.asarray(mask).reshape(B, 1)
        out_X = jnp.where(m, -xf, xf).reshape(xb.shape)
    else:
        x2d = xb.reshape(B, D)
        if mask.all():
            out2d = _pallas_apply(x2d, sign=None)
        elif x2d.dtype == jnp.float32:
            # Already f32: alias output to input and visit masked rows only,
            # so HBM bytes scale with the masked fraction.
            row_idx = jnp.asarray(np.nonzero(mask)[0].astype(np.int32))
            try:
                out2d = _negate_masked_rows_inplace(row_idx, x2d)
            except Exception:
                # Robust fallback: dense read/modify/write with per-row sign.
                sign = jnp.asarray(np.where(mask, -1.0, 1.0),
                                   dtype=jnp.float32).reshape(B, 1)
                out2d = _pallas_apply(xb.reshape(B, D), sign=sign)
        else:
            sign = jnp.asarray(np.where(mask, -1.0, 1.0),
                               dtype=jnp.float32).reshape(B, 1)
            out2d = _pallas_apply(x2d, sign=sign)
        out_X = out2d.reshape(xb.shape)

    out_X = out_X.reshape(orig_shape)
    # Sign flip leaves labels unchanged, so `out_y[mask] = tr_y` is a no-op.
    if y is not None:
        return out_X, out_y
    return out_X


if __name__ == "__main__":
    key = jax.random.PRNGKey(0)
    kx, ky, km = jax.random.split(key, 3)

    # --- Tiny EEG-like batch: (batch=2, channels=4, time=16) ----------------
    B, C, T = 2, 4, 16
    X = jax.random.normal(kx, (B, C, T), dtype=jnp.float32)
    y = jax.random.randint(ky, (B,), 0, 2)
    prob, seed = 0.6, 0

    # Mixed-mask Pallas path (force past the small-input XLA fallback):
    # f32 input -> masked-rows in-place kernel (or dense fallback).
    out_X, out_y = transform_forward(X, y, probability=prob, random_state=seed,
                                     force_pallas=True)
    out_X = jax.block_until_ready(out_X)
    out_y = jax.block_until_ready(out_y)

    rng = np.random.RandomState(seed)
    mask_ref = prob > rng.uniform(size=B)       # seed 0, B=2 -> [True, False]
    ref = np.asarray(X).copy()
    ref[mask_ref] = -ref[mask_ref]
    assert out_X.shape == X.shape and out_X.dtype == jnp.float32
    np.testing.assert_allclose(np.asarray(out_X), ref, rtol=1e-6, atol=1e-6)
    np.testing.assert_array_equal(np.asarray(out_y), np.asarray(y))

    # All-true fast path + 2-D input (batch dim added then removed) + y=None.
    x2d = X[0]
    out2d = jax.block_until_ready(
        transform_forward(x2d, probability=1.0, random_state=seed,
                          force_pallas=True))
    assert out2d.shape == x2d.shape and out2d.dtype == jnp.float32
    np.testing.assert_allclose(np.asarray(out2d), -np.asarray(x2d),
                               rtol=1e-6, atol=1e-6)

    # All-false fast path: kernel skipped, output is just the f32 cast of X.
    out_none = jax.block_until_ready(
        transform_forward(X, probability=0.0, random_state=seed))
    np.testing.assert_allclose(np.asarray(out_none), np.asarray(X),
                               rtol=0, atol=0)

    # Small-input XLA fallback (no force): same numerics as the kernel path.
    out_small = jax.block_until_ready(
        transform_forward(X, probability=prob, random_state=seed))
    np.testing.assert_allclose(np.asarray(out_small), ref, rtol=1e-6, atol=1e-6)

    # Fused-cast path: non-f32 (bf16) input goes through the dense sign kernel.
    Xb = X.astype(jnp.bfloat16)
    outb, _ = transform_forward(Xb, y, probability=prob, random_state=seed,
                                force_pallas=True)
    outb = jax.block_until_ready(outb)
    assert outb.dtype == jnp.float32
    refb = np.asarray(Xb.astype(jnp.float32)).copy()
    refb[mask_ref] = -refb[mask_ref]
    np.testing.assert_allclose(np.asarray(outb), refb, rtol=0, atol=0)

    # Larger batch above the fallback threshold: exercises the masked in-place
    # path and the multi-block grid naturally (no force flag).
    B2, C2, T2 = 16, 8, 2048
    X2 = jax.random.normal(km, (B2, C2, T2), dtype=jnp.float32)
    prob2, seed2 = 0.5, 7
    out_X2 = jax.block_until_ready(
        transform_forward(X2, probability=prob2, random_state=seed2))
    rng2 = np.random.RandomState(seed2)
    mask2 = prob2 > rng2.uniform(size=B2)
    ref2 = np.asarray(X2).copy()
    ref2[mask2] = -ref2[mask2]
    assert out_X2.shape == X2.shape and out_X2.dtype == jnp.float32
    np.testing.assert_allclose(np.asarray(out_X2), ref2, rtol=1e-6, atol=1e-6)

    print("KERNEL_OK")
</pallas_src>

<mosaic_0001>
module attributes {stable_mosaic.version = 11 : i64} {
  func.func @_masked_signflip_kernel(%arg0: i32, %arg1: i32, %arg2: memref<2x64xf32, #tpu.memory_space<vmem>>, %arg3: memref<2x1xf32, #tpu.memory_space<vmem>>, %arg4: memref<2x64xf32, #tpu.memory_space<vmem>>) attributes {dimension_semantics = [#tpu.dimension_semantics<parallel>, #tpu.dimension_semantics<parallel>], iteration_bounds = array<i64: 1, 1>, scalar_prefetch = 0 : i64, scratch_operands = 0 : i64, tpu.core_type = #tpu.core_type<tc>, window_params = [{transform_indices = @transform_0, window_bounds = array<i64: 2, 64>}, {transform_indices = @transform_1, window_bounds = array<i64: 2, 1>}, {transform_indices = @transform_2, window_bounds = array<i64: 2, 64>}]} {
    %c0 = arith.constant 0 : index
    %c0_0 = arith.constant 0 : index
    %0 = vector.load %arg2[%c0, %c0_0] : memref<2x64xf32, #tpu.memory_space<vmem>>, vector<2x64xf32>
    %c0_1 = arith.constant 0 : index
    %c0_2 = arith.constant 0 : index
    %1 = vector.load %arg3[%c0_1, %c0_2] : memref<2x1xf32, #tpu.memory_space<vmem>>, vector<2x1xf32>
    %2 = vector.broadcast %1 : vector<2x1xf32> to vector<2x64xf32>
    %3 = arith.mulf %0, %2 : vector<2x64xf32>
    %c0_3 = arith.constant 0 : index
    %c0_4 = arith.constant 0 : index
    %4 = vector.load %arg4[%c0_3, %c0_4] : memref<2x64xf32, #tpu.memory_space<vmem>>, vector<2x64xf32>
    tpu.vector_store %arg4[%c0_3, %c0_4], %3 {strides = array<i32>} : memref<2x64xf32, #tpu.memory_space<vmem>>, vector<2x64xf32>,
    return
  }
  func.func @transform_0(%arg0: i32, %arg1: i32) -> (i32, i32) {
    %c0_i32 = arith.constant 0 : i32
    return %arg0, %arg1 : i32, i32
  }
  func.func @transform_1(%arg0: i32, %arg1: i32) -> (i32, i32) {
    %c0_i32 = arith.constant 0 : i32
    %c0_i32_0 = arith.constant 0 : i32
    return %arg0, %c0_i32 : i32, i32
  }
  func.func @transform_2(%arg0: i32, %arg1: i32) -> (i32, i32) {
    %c0_i32 = arith.constant 0 : i32
    return %arg0, %arg1 : i32, i32
  }
}

</mosaic_0001>

<llo_original>
// kernel: tpu_custom_call.1
$region0: #{tpu_custom_call.1}
  #allocation0 [shape = 'u32[]', space=smem, size = 0x4, offset = 0x4, fixed_abs, tag = 'smem constant byte address 0x4 - core index']
  #allocation1 [shape = 'u32[72,128]{1,0:T(1,128)}', space=vmem, size = 0x9000, scoped, tag = 'internal scratch']
  %s0 = inlined_call_operand.vmem [shape: f32[2,64], index: 0, kind: input, shape index: {}]
  %s1 = inlined_call_operand.vmem [shape: f32[2,1], index: 1, kind: input, shape index: {}]
  %s2 = inlined_call_operand.hbm [shape: f32[2,64], index: 2, kind: output, shape index: {}]
  %s3 = sld [smem:[#allocation0]]
  $region18: #{tpu_custom_call.1} parent=0
    _
  %s5 = ssub.s32 1, %s3
  %s6 = scalar_select 0, %s5, %s3
  $region1: #{tpu_custom_call.1} parent=0
    #allocation2 [shape = 'u8[1024]{0}', space=vmem, size = 0x400, scoped, tag = 'output window, operand 0, single buffered']
    #allocation3 [shape = 's32[1]{0}', space=sflag, size = 0x4, scoped, tag = 'scoped memory for tpu_custom_call.1']
    %7 = vsyncpa [#allocation3], 0
    // Predicated region
    $region2: #{tpu_custom_call.1} parent=1 // pred_check
      _
    $region3: #{tpu_custom_call.1} parent=1 // pred_check_branch
      %9 = sbr.rel (0) target = $region5
    $region4: #{tpu_custom_call.1} parent=1 // pred_region
      _
    $region5: #{tpu_custom_call.1} parent=1 // pred_fallthru
      _
    // Predicated region
    $region6: #{tpu_custom_call.1} parent=1 // pred_check
      _
    $region7: #{tpu_custom_call.1} parent=1 // pred_check_branch
      %11 = sbr.rel (0) target = $region9
    $region8: #{tpu_custom_call.1} parent=1 // pred_region
      _
    $region9: #{tpu_custom_call.1} parent=1 // pred_fallthru
      _
    %v12 = vld [vmem:[%s0] sm:$0x3]
    %v13 = vld [vmem:[%s1] sm:$0x3]
    %15 = vset.pattern.permute.xlu0 0
    %16 = vperm.xlu0 %15, %v13
    %v17 = vpop.permute.xlu0 %16
    %v19 = vmul.f32 %v12, %v17
    %vm20 = vcmask 517120
    %21 = vst.msk [vmem:[#allocation2] sm:$0x3] %vm20, %v19
    // Predicated region
    $region10: #{tpu_custom_call.1} parent=1 // pred_check
      _
    $region11: #{tpu_custom_call.1} parent=1 // pred_check_branch
      %23 = sbr.rel (0) target = $region13
    $region12: #{tpu_custom_call.1} parent=1 // pred_region
      %25 = vsyncadd [#allocation3], 0
      %s27 = sshll.u32 [#allocation2], 4
      %s28 = int_to_ptr.vmem [resolvable:$true] %s27
      %s29 = sshll.u32 %s2, 4
      %s30 = int_to_ptr.hbm [resolvable:$true] %s29
      %32 = dma.vmem_to_hbm [thread:$0]  %s28, 32, %s30, [#allocation3]
    $region13: #{tpu_custom_call.1} parent=1 // pred_fallthru
      _
    // Predicated region
    $region14: #{tpu_custom_call.1} parent=1 // pred_check
      _
    $region15: #{tpu_custom_call.1} parent=1 // pred_check_branch
      %34 = sbr.rel (0) target = $region17
    $region16: #{tpu_custom_call.1} parent=1 // pred_region
      %36 = dma.done [#allocation3], 32
    $region17: #{tpu_custom_call.1} parent=1 // pred_fallthru
      _
    %37 = vsyncpa [#allocation3], 1

</llo_original>
